<compile_context>
chip_gen: v5e
topology: v5e:2x2
jax: 0.10.0
libtpu: 0.0.40
codegen_flags: <defaults>
</compile_context>

<pallas_src>
import math
import functools

import jax
import jax.numpy as jnp
from jax.experimental import pallas as pl
from jax.experimental.pallas import tpu as pltpu


def _tile(n: int, target: int) -> int:
    """Largest tile <= target that divides n and is a multiple of 8 (else n)."""
    if n <= target:
        return n
    t = (target // 8) * 8
    while t >= 8:
        if n % t == 0:
            return t
        t -= 8
    return n


# ---------------------------------------------------------------------------
# Kernel A: K and V linear projections over flattened (B*S, D) rows.
# ---------------------------------------------------------------------------
def _kv_proj_kernel(kx_ref, vx_ref, wk_ref, bk_ref, wv_ref, bv_ref,
                    ko_ref, vo_ref):
    k = jnp.dot(kx_ref[...], wk_ref[...],
                preferred_element_type=jnp.float32) + bk_ref[0]
    v = jnp.dot(vx_ref[...], wv_ref[...],
                preferred_element_type=jnp.float32) + bv_ref[0]
    ko_ref[...] = k.astype(ko_ref.dtype)
    vo_ref[...] = v.astype(vo_ref.dtype)


# ---------------------------------------------------------------------------
# Kernel B: fused Q projection + flash attention + output projection.
# grid = (batch, q_tiles, kv_tiles); the KV axis is the innermost reduction.
# ---------------------------------------------------------------------------
def _flash_mha_kernel(q_ref, k_ref, v_ref, wq_ref, bq_ref, wo_ref, bo_ref,
                      o_ref,
                      q_sc, m_sc, l_sc, acc_sc,
                      *, n_heads: int, dim_k: int):
    ki = pl.program_id(2)

    @pl.when(ki == 0)
    def _init():
        # Project the Q tile once per (batch, q-tile).  The 1/sqrt(dim_k)
        # scale is already folded into wq / bq by the wrapper.
        q = jnp.dot(q_ref[0], wq_ref[...],
                    preferred_element_type=jnp.float32) + bq_ref[0]
        q_sc[...] = q.astype(q_sc.dtype)
        m_sc[...] = jnp.full(m_sc.shape, -jnp.inf, dtype=m_sc.dtype)
        l_sc[...] = jnp.zeros(l_sc.shape, dtype=l_sc.dtype)
        acc_sc[...] = jnp.zeros(acc_sc.shape, dtype=acc_sc.dtype)

    tq, dim = q_sc.shape
    tk = k_ref.shape[1]

    # (tile, D) -> (tile, H, dk) reshape views: no explicit head transpose.
    q3 = q_sc[...].reshape(tq, n_heads, dim_k)
    k3 = k_ref[0].reshape(tk, n_heads, dim_k)
    v3 = v_ref[0].reshape(tk, n_heads, dim_k)

    # Head-batched Q.K^T: bf16 inputs, f32 accumulation on the MXU.
    s = jnp.einsum('qhd,khd->hqk', q3, k3,
                   preferred_element_type=jnp.float32)          # (H, tq, tk)

    # Online softmax (f32).
    m_prev = m_sc[...]
    m_new = jnp.maximum(m_prev, jnp.max(s, axis=-1, keepdims=True))
    alpha = jnp.exp(m_prev - m_new)
    p = jnp.exp(s - m_new)                                      # unnormalized
    l_sc[...] = alpha * l_sc[...] + jnp.sum(p, axis=-1, keepdims=True)
    acc_sc[...] = alpha * acc_sc[...] + jnp.einsum(
        'hqk,khd->hqd', p.astype(jnp.bfloat16), v3,
        preferred_element_type=jnp.float32)
    m_sc[...] = m_new

    @pl.when(ki == pl.num_programs(2) - 1)
    def _finalize():
        inv_l = pl.reciprocal(l_sc[...], approx=True)           # EUP slot
        ctx = (acc_sc[...] * inv_l).astype(jnp.bfloat16)        # (H, tq, dk)
        # Output projection contracted per head against Wo viewed as
        # (H, dk, D): ctx[h] is a free leading-axis slice, so the combined
        # (tq, D) result falls out with no combine-heads transpose.
        out = jnp.broadcast_to(bo_ref[0], (tq, dim)).astype(jnp.float32)
        for h in range(n_heads):                                # static unroll
            out = out + jnp.dot(ctx[h], wo_ref[h],
                                preferred_element_type=jnp.float32)
        o_ref[0] = out.astype(o_ref.dtype)


def multi_head_attention(Q, K, V, params, *, n_heads: int):
    """Q, K, V: [B, S, D]. params: (D, D) weights stored as (in, out), (D,) biases."""
    B, S, D = Q.shape
    dim_k = D // n_heads
    scale = 1.0 / math.sqrt(dim_k)
    f32, bf16 = jnp.float32, jnp.bfloat16

    # bf16 MXU inputs/weights (autocast-style); f32 biases & accumulation.
    wq = (params["wq"] * scale).astype(bf16)          # scale folded into Wq/bq
    bq = (params["bq"] * scale).astype(f32).reshape(1, D)
    wk = params["wk"].astype(bf16)
    bk = params["bk"].astype(f32).reshape(1, D)
    wv = params["wv"].astype(bf16)
    bv = params["bv"].astype(f32).reshape(1, D)
    wo3 = params["wo"].astype(bf16).reshape(n_heads, dim_k, D)
    bo = params["bo"].astype(f32).reshape(1, D)

    # --- Kernel A: K / V projections over flattened rows ---------------------
    BS = B * S
    tr = _tile(BS, 512)
    kx = K.astype(bf16).reshape(BS, D)
    vx = V.astype(bf16).reshape(BS, D)
    row_spec = pl.BlockSpec((tr, D), lambda i: (i, 0))
    wmat_spec = pl.BlockSpec((D, D), lambda i: (0, 0))
    bvec_spec = pl.BlockSpec((1, D), lambda i: (0, 0))
    k_proj, v_proj = pl.pallas_call(
        _kv_proj_kernel,
        out_shape=(jax.ShapeDtypeStruct((BS, D), bf16),
                   jax.ShapeDtypeStruct((BS, D), bf16)),
        grid_spec=pltpu.PrefetchScalarGridSpec(
            num_scalar_prefetch=0,
            grid=(BS // tr,),
            in_specs=[row_spec, row_spec,
                      wmat_spec, bvec_spec, wmat_spec, bvec_spec],
            out_specs=[row_spec, row_spec]),
        compiler_params=pltpu.CompilerParams(
            dimension_semantics=("parallel",)),
    )(kx, vx, wk, bk, wv, bv)
    k_proj = k_proj.reshape(B, S, D)
    v_proj = v_proj.reshape(B, S, D)

    # --- Kernel B: fused Q-proj + flash attention + output projection --------
    tq = _tile(S, 512)
    tk = _tile(S, 512)
    nq, nk = S // tq, S // tk
    qx = Q.astype(bf16)

    q_spec = pl.BlockSpec((1, tq, D), lambda b, qi, ki: (b, qi, 0))
    kv_spec = pl.BlockSpec((1, tk, D), lambda b, qi, ki: (b, ki, 0))
    wq_spec = pl.BlockSpec((D, D), lambda b, qi, ki: (0, 0))
    bias_spec = pl.BlockSpec((1, D), lambda b, qi, ki: (0, 0))
    wo_spec = pl.BlockSpec((n_heads, dim_k, D), lambda b, qi, ki: (0, 0, 0))
    o_spec = pl.BlockSpec((1, tq, D), lambda b, qi, ki: (b, qi, 0))

    kernel = functools.partial(_flash_mha_kernel, n_heads=n_heads, dim_k=dim_k)

    return pl.pallas_call(
        kernel,
        out_shape=jax.ShapeDtypeStruct((B, S, D), f32),
        grid_spec=pltpu.PrefetchScalarGridSpec(
            num_scalar_prefetch=0,
            grid=(B, nq, nk),
            in_specs=[q_spec, kv_spec, kv_spec,
                      wq_spec, bias_spec, wo_spec, bias_spec],
            out_specs=o_spec,
            scratch_shapes=[
                pltpu.VMEM((tq, D), bf16),                 # projected Q tile
                pltpu.VMEM((n_heads, tq, 1), f32),         # running max
                pltpu.VMEM((n_heads, tq, 1), f32),         # running denominator
                pltpu.VMEM((n_heads, tq, dim_k), f32),     # running PV accum
            ]),
        compiler_params=pltpu.CompilerParams(
            dimension_semantics=("parallel", "parallel", "arbitrary"),
            vmem_limit_bytes=64 * 1024 * 1024),
    )(qx, k_proj, v_proj, wq, bq, wo3, bo)


def _reference(Q, K, V, params, n_heads):
    """Plain-JAX f32 reference mirroring the PyTorch forward."""
    B, S, D = Q.shape
    dk = D // n_heads

    def lin(x, w, b):
        return x @ w + b

    def split(x):
        return x.reshape(B, S, n_heads, dk).transpose(0, 2, 1, 3)

    q = split(lin(Q, params["wq"], params["bq"]))
    k = split(lin(K, params["wk"], params["bk"]))
    v = split(lin(V, params["wv"], params["bv"]))
    scores = jnp.einsum('bhqd,bhkd->bhqk', q, k) / math.sqrt(dk)
    p = jax.nn.softmax(scores, axis=-1)
    o = jnp.einsum('bhqk,bhkd->bhqd', p, v)
    o = o.transpose(0, 2, 1, 3).reshape(B, S, D)
    return lin(o, params["wo"], params["bo"])


if __name__ == "__main__":
    # Small shapes consistent with the module: batch=2, seq=8, dim=32, heads=4.
    B, S, D, H = 2, 8, 32, 4

    key = jax.random.PRNGKey(0)
    keys = jax.random.split(key, 12)

    # Weights stored as (in, out) == W.T of nn.Linear's (out, in) weight, so
    # the kernel computes x @ W + b.
    scale = 1.0 / math.sqrt(D)
    params = {
        "wq": jax.random.uniform(keys[0], (D, D), jnp.float32, -scale, scale),
        "bq": jax.random.uniform(keys[1], (D,),   jnp.float32, -scale, scale),
        "wk": jax.random.uniform(keys[2], (D, D), jnp.float32, -scale, scale),
        "bk": jax.random.uniform(keys[3], (D,),   jnp.float32, -scale, scale),
        "wv": jax.random.uniform(keys[4], (D, D), jnp.float32, -scale, scale),
        "bv": jax.random.uniform(keys[5], (D,),   jnp.float32, -scale, scale),
        "wo": jax.random.uniform(keys[6], (D, D), jnp.float32, -scale, scale),
        "bo": jax.random.uniform(keys[7], (D,),   jnp.float32, -scale, scale),
    }

    Q = jax.random.normal(keys[8],  (B, S, D), jnp.float32)
    K = jax.random.normal(keys[9],  (B, S, D), jnp.float32)
    V = jax.random.normal(keys[10], (B, S, D), jnp.float32)

    out = multi_head_attention(Q, K, V, params, n_heads=H)
    out = jax.block_until_ready(out)

    # Tolerance reflects bf16 MXU inputs with f32 accumulation (the PyTorch
    # module runs its matmuls under autocast, i.e. reduced precision, too).
    ref = _reference(Q, K, V, params, H)
    assert out.shape == (B, S, D)
    assert jnp.allclose(out, ref, atol=5e-2, rtol=5e-2), \
        f"mismatch vs JAX reference: max abs err {jnp.max(jnp.abs(out - ref))}"

    print("KERNEL_OK")
</pallas_src>

<mosaic_0001>
module attributes {stable_mosaic.version = 11 : i64} {
  func.func @_kv_proj_kernel(%arg0: i32, %arg1: memref<16x32xbf16, #tpu.memory_space<vmem>>, %arg2: memref<16x32xbf16, #tpu.memory_space<vmem>>, %arg3: memref<32x32xbf16, #tpu.memory_space<vmem>>, %arg4: memref<1x32xf32, #tpu.memory_space<vmem>>, %arg5: memref<32x32xbf16, #tpu.memory_space<vmem>>, %arg6: memref<1x32xf32, #tpu.memory_space<vmem>>, %arg7: memref<16x32xbf16, #tpu.memory_space<vmem>>, %arg8: memref<16x32xbf16, #tpu.memory_space<vmem>>) attributes {dimension_semantics = [#tpu.dimension_semantics<parallel>], iteration_bounds = array<i64: 1>, scalar_prefetch = 0 : i64, scratch_operands = 0 : i64, tpu.core_type = #tpu.core_type<tc>, window_params = [{transform_indices = @transform_0, window_bounds = array<i64: 16, 32>}, {transform_indices = @transform_1, window_bounds = array<i64: 16, 32>}, {pipeline_mode = #tpu.pipeline_mode<synchronous>, transform_indices = @transform_2, window_bounds = array<i64: 32, 32>}, {pipeline_mode = #tpu.pipeline_mode<synchronous>, transform_indices = @transform_3, window_bounds = array<i64: 1, 32>}, {pipeline_mode = #tpu.pipeline_mode<synchronous>, transform_indices = @transform_4, window_bounds = array<i64: 32, 32>}, {pipeline_mode = #tpu.pipeline_mode<synchronous>, transform_indices = @transform_5, window_bounds = array<i64: 1, 32>}, {transform_indices = @transform_6, window_bounds = array<i64: 16, 32>}, {transform_indices = @transform_7, window_bounds = array<i64: 16, 32>}]} {
    %c0 = arith.constant 0 : index
    %c0_0 = arith.constant 0 : index
    %0 = vector.load %arg1[%c0, %c0_0] : memref<16x32xbf16, #tpu.memory_space<vmem>>, vector<16x32xbf16>
    %c0_1 = arith.constant 0 : index
    %c0_2 = arith.constant 0 : index
    %1 = vector.load %arg3[%c0_1, %c0_2] : memref<32x32xbf16, #tpu.memory_space<vmem>>, vector<32x32xbf16>
    %cst = arith.constant dense<0.000000e+00> : vector<16x32xf32>
    %2 = tpu.matmul %0, %1, %cst {dimension_numbers = #tpu.dot_dimension_numbers<[1], [0], [0], [1], [0, 0, 1, 1], [], []>} : vector<16x32xbf16>, vector<32x32xbf16>, vector<16x32xf32> -> vector<16x32xf32>
    %c0_3 = arith.constant 0 : index
    %c0_4 = arith.constant 0 : index
    %3 = vector.load %arg4[%c0_3, %c0_4] : memref<1x32xf32, #tpu.memory_space<vmem>>, vector<1x32xf32>
    %4 = vector.shape_cast %3 : vector<1x32xf32> to vector<32xf32>
    %5 = vector.shape_cast %4 : vector<32xf32> to vector<1x32xf32>
    %6 = vector.broadcast %5 : vector<1x32xf32> to vector<16x32xf32>
    %7 = arith.addf %2, %6 : vector<16x32xf32>
    %c0_5 = arith.constant 0 : index
    %c0_6 = arith.constant 0 : index
    %8 = vector.load %arg2[%c0_5, %c0_6] : memref<16x32xbf16, #tpu.memory_space<vmem>>, vector<16x32xbf16>
    %c0_7 = arith.constant 0 : index
    %c0_8 = arith.constant 0 : index
    %9 = vector.load %arg5[%c0_7, %c0_8] : memref<32x32xbf16, #tpu.memory_space<vmem>>, vector<32x32xbf16>
    %cst_9 = arith.constant dense<0.000000e+00> : vector<16x32xf32>
    %10 = tpu.matmul %8, %9, %cst_9 {dimension_numbers = #tpu.dot_dimension_numbers<[1], [0], [0], [1], [0, 0, 1, 1], [], []>} : vector<16x32xbf16>, vector<32x32xbf16>, vector<16x32xf32> -> vector<16x32xf32>
    %c0_10 = arith.constant 0 : index
    %c0_11 = arith.constant 0 : index
    %11 = vector.load %arg6[%c0_10, %c0_11] : memref<1x32xf32, #tpu.memory_space<vmem>>, vector<1x32xf32>
    %12 = vector.shape_cast %11 : vector<1x32xf32> to vector<32xf32>
    %13 = vector.shape_cast %12 : vector<32xf32> to vector<1x32xf32>
    %14 = vector.broadcast %13 : vector<1x32xf32> to vector<16x32xf32>
    %15 = arith.addf %10, %14 : vector<16x32xf32>
    %16 = arith.truncf %7 : vector<16x32xf32> to vector<16x32xbf16>
    %c0_12 = arith.constant 0 : index
    %c0_13 = arith.constant 0 : index
    %17 = vector.load %arg7[%c0_12, %c0_13] : memref<16x32xbf16, #tpu.memory_space<vmem>>, vector<16x32xbf16>
    tpu.vector_store %arg7[%c0_12, %c0_13], %16 {strides = array<i32>} : memref<16x32xbf16, #tpu.memory_space<vmem>>, vector<16x32xbf16>,
    %18 = arith.truncf %15 : vector<16x32xf32> to vector<16x32xbf16>
    %c0_14 = arith.constant 0 : index
    %c0_15 = arith.constant 0 : index
    %19 = vector.load %arg8[%c0_14, %c0_15] : memref<16x32xbf16, #tpu.memory_space<vmem>>, vector<16x32xbf16>
    tpu.vector_store %arg8[%c0_14, %c0_15], %18 {strides = array<i32>} : memref<16x32xbf16, #tpu.memory_space<vmem>>, vector<16x32xbf16>,
    return
  }
  func.func @transform_0(%arg0: i32) -> (i32, i32) {
    %c0_i32 = arith.constant 0 : i32
    %c0_i32_0 = arith.constant 0 : i32
    return %arg0, %c0_i32 : i32, i32
  }
  func.func @transform_1(%arg0: i32) -> (i32, i32) {
    %c0_i32 = arith.constant 0 : i32
    %c0_i32_0 = arith.constant 0 : i32
    return %arg0, %c0_i32 : i32, i32
  }
  func.func @transform_2(%arg0: i32) -> (i32, i32) {
    %c0_i32 = arith.constant 0 : i32
    %c0_i32_0 = arith.constant 0 : i32
    %c0_i32_1 = arith.constant 0 : i32
    return %c0_i32, %c0_i32_0 : i32, i32
  }
  func.func @transform_3(%arg0: i32) -> (i32, i32) {
    %c0_i32 = arith.constant 0 : i32
    %c0_i32_0 = arith.constant 0 : i32
    %c0_i32_1 = arith.constant 0 : i32
    return %c0_i32, %c0_i32_0 : i32, i32
  }
  func.func @transform_4(%arg0: i32) -> (i32, i32) {
    %c0_i32 = arith.constant 0 : i32
    %c0_i32_0 = arith.constant 0 : i32
    %c0_i32_1 = arith.constant 0 : i32
    return %c0_i32, %c0_i32_0 : i32, i32
  }
  func.func @transform_5(%arg0: i32) -> (i32, i32) {
    %c0_i32 = arith.constant 0 : i32
    %c0_i32_0 = arith.constant 0 : i32
    %c0_i32_1 = arith.constant 0 : i32
    return %c0_i32, %c0_i32_0 : i32, i32
  }
  func.func @transform_6(%arg0: i32) -> (i32, i32) {
    %c0_i32 = arith.constant 0 : i32
    %c0_i32_0 = arith.constant 0 : i32
    return %arg0, %c0_i32 : i32, i32
  }
  func.func @transform_7(%arg0: i32) -> (i32, i32) {
    %c0_i32 = arith.constant 0 : i32
    %c0_i32_0 = arith.constant 0 : i32
    return %arg0, %c0_i32 : i32, i32
  }
}

</mosaic_0001>

<llo_original>
// kernel: tpu_custom_call.1
$region0: #{tpu_custom_call.1}
  #allocation0 [shape = 'u32[]', space=smem, size = 0x4, offset = 0x4, fixed_abs, tag = 'smem constant byte address 0x4 - core index']
  #allocation1 [shape = 'u32[72,128]{1,0:T(1,128)}', space=vmem, size = 0x9000, scoped, tag = 'internal scratch']
  %s0 = inlined_call_operand.hbm [shape: bf16[16,32], index: 0, kind: input, shape index: {}]
  %s1 = inlined_call_operand.hbm [shape: bf16[16,32], index: 1, kind: input, shape index: {}]
  %s2 = inlined_call_operand.hbm [shape: bf16[32,32], index: 2, kind: input, shape index: {}]
  %s3 = inlined_call_operand.vmem [shape: f32[1,32], index: 3, kind: input, shape index: {}]
  %s4 = inlined_call_operand.hbm [shape: bf16[32,32], index: 4, kind: input, shape index: {}]
  %s5 = inlined_call_operand.vmem [shape: f32[1,32], index: 5, kind: input, shape index: {}]
  %s6 = inlined_call_operand.hbm [shape: bf16[16,32], index: 6, kind: output, shape index: {0}]
  %s7 = inlined_call_operand.hbm [shape: bf16[16,32], index: 7, kind: output, shape index: {1}]
  %8 = xla_tuple %s6, %s7
  %s9 = sld [smem:[#allocation0]]
  $region58: #{tpu_custom_call.1} parent=0
    _
  %s11 = ssub.s32 1, %s9
  %s12 = scalar_select 0, %s11, %s9
  $region1: #{tpu_custom_call.1} parent=0
    #allocation2 [shape = 'u8[4096]{0}', space=vmem, size = 0x1000, scoped, tag = 'input window, operand 0, single buffered']
    #allocation3 [shape = 's32[1]{0}', space=sflag, size = 0x4, scoped, tag = 'scoped memory for tpu_custom_call.1']
    #allocation4 [shape = 's32[1]{0}', space=sflag, size = 0x4, scoped, tag = 'scoped memory for tpu_custom_call.1']
    #allocation5 [shape = 'u8[4096]{0}', space=vmem, size = 0x1000, scoped, tag = 'input window, operand 1, single buffered']
    #allocation6 [shape = 's32[1]{0}', space=sflag, size = 0x4, scoped, tag = 'scoped memory for tpu_custom_call.1']
    #allocation7 [shape = 'u8[8192]{0}', space=vmem, size = 0x2000, scoped, tag = 'input window, operand 2, single buffered']
    #allocation8 [shape = 'u8[8192]{0}', space=vmem, size = 0x2000, scoped, tag = 'input window, operand 4, single buffered']
    #allocation9 [shape = 's32[1]{0}', space=sflag, size = 0x4, scoped, tag = 'scoped memory for tpu_custom_call.1']
    #allocation10 [shape = 'u8[4096]{0}', space=vmem, size = 0x1000, scoped, tag = 'output window, operand 0, single buffered']
    #allocation11 [shape = 'u8[4096]{0}', space=vmem, size = 0x1000, scoped, tag = 'output window, operand 1, single buffered']
    #allocation12 [shape = 's32[1]{0}', space=sflag, size = 0x4, scoped, tag = 'scoped memory for tpu_custom_call.1']
    %13 = vsyncpa [#allocation3], 0
    %14 = vsyncpa [#allocation6], 0
    %15 = vsyncpa [#allocation9], 0
    %16 = vsyncpa [#allocation4], 0
    %17 = vsyncpa [#allocation12], 0
    // Predicated region
    $region2: #{tpu_custom_call.1} parent=1 // pred_check
      _
    $region3: #{tpu_custom_call.1} parent=1 // pred_check_branch
      %19 = sbr.rel (0) target = $region5
    $region4: #{tpu_custom_call.1} parent=1 // pred_region
      %21 = vsyncadd [#allocation3], 0
      %s22 = sshll.u32 %s0, 4
      %s23 = int_to_ptr.hbm [resolvable:$true] %s22
      %s24 = sshll.u32 [#allocation2], 4
      %s25 = int_to_ptr.vmem [resolvable:$true] %s24
      %30 = dma.hbm_to_vmem [thread:$0]  %s23, 128, %s25, [#allocation3], 64, 64, 4
    $region5: #{tpu_custom_call.1} parent=1 // pred_fallthru
      _
    // Predicated region
    $region6: #{tpu_custom_call.1} parent=1 // pred_check
      _
    $region7: #{tpu_custom_call.1} parent=1 // pred_check_branch
      %32 = sbr.rel (0) target = $region9
    $region8: #{tpu_custom_call.1} parent=1 // pred_region
      %34 = vsyncadd [#allocation6], 0
      %s35 = sshll.u32 %s1, 4
      %s36 = int_to_ptr.hbm [resolvable:$true] %s35
      %s37 = sshll.u32 [#allocation5], 4
      %s38 = int_to_ptr.vmem [resolvable:$true] %s37
      %43 = dma.hbm_to_vmem [thread:$0]  %s36, 128, %s38, [#allocation6], 64, 64, 4
    $region9: #{tpu_custom_call.1} parent=1 // pred_fallthru
      _
    // Predicated region
    $region10: #{tpu_custom_call.1} parent=1 // pred_check
      _
    $region11: #{tpu_custom_call.1} parent=1 // pred_check_branch
      %45 = sbr.rel (0) target = $region13
    $region12: #{tpu_custom_call.1} parent=1 // pred_region
      %47 = vsyncadd [#allocation6], 0
      %s48 = sshll.u32 %s2, 4
      %s49 = int_to_ptr.hbm [resolvable:$true] %s48
      %s50 = sshll.u32 [#allocation7], 4
      %s51 = int_to_ptr.vmem [resolvable:$true] %s50
      %56 = dma.hbm_to_vmem [thread:$0]  %s49, 256, %s51, [#allocation6], 64, 64, 4
    $region13: #{tpu_custom_call.1} parent=1 // pred_fallthru
      _
    // Predicated region
    $region14: #{tpu_custom_call.1} parent=1 // pred_check
      _
    $region15: #{tpu_custom_call.1} parent=1 // pred_check_branch
      %58 = sbr.rel (0) target = $region17
    $region16: #{tpu_custom_call.1} parent=1 // pred_region
      _
    $region17: #{tpu_custom_call.1} parent=1 // pred_fallthru
      _
    // Predicated region
    $region18: #{tpu_custom_call.1} parent=1 // pred_check
      _
    $region19: #{tpu_custom_call.1} parent=1 // pred_check_branch
      %60 = sbr.rel (0) target = $region21
    $region20: #{tpu_custom_call.1} parent=1 // pred_region
      %62 = vsyncadd [#allocation9], 0
      %s63 = sshll.u32 %s4, 4
      %s64 = int_to_ptr.hbm [resolvable:$true] %s63
      %s65 = sshll.u32 [#allocation8], 4
      %s66 = int_to_ptr.vmem [resolvable:$true] %s65
      %71 = dma.hbm_to_vmem [thread:$0]  %s64, 256, %s66, [#allocation9], 64, 64, 4
    $region21: #{tpu_custom_call.1} parent=1 // pred_fallthru
      _
    // Predicated region
    $region22: #{tpu_custom_call.1} parent=1 // pred_check
      _
    $region23: #{tpu_custom_call.1} parent=1 // pred_check_branch
      %73 = sbr.rel (0) target = $region25
    $region24: #{tpu_custom_call.1} parent=1 // pred_region
      _
    $region25: #{tpu_custom_call.1} parent=1 // pred_fallthru
      _
    // Predicated region
    $region26: #{tpu_custom_call.1} parent=1 // pred_check
      _
    $region27: #{tpu_custom_call.1} parent=1 // pred_check_branch
      %75 = sbr.rel (0) target = $region29
    $region28: #{tpu_custom_call.1} parent=1 // pred_region
      %77 = dma.done [#allocation3], 128
    $region29: #{tpu_custom_call.1} parent=1 // pred_fallthru
      _
    // Predicated region
    $region30: #{tpu_custom_call.1} parent=1 // pred_check
      _
    $region31: #{tpu_custom_call.1} parent=1 // pred_check_branch
      %79 = sbr.rel (0) target = $region33
    $region32: #{tpu_custom_call.1} parent=1 // pred_region
      %81 = dma.done [#allocation6], 128
    $region33: #{tpu_custom_call.1} parent=1 // pred_fallthru
      _
    // Predicated region
    $region34: #{tpu_custom_call.1} parent=1 // pred_check
      _
    $region35: #{tpu_custom_call.1} parent=1 // pred_check_branch
      %83 = sbr.rel (0) target = $region37
    $region36: #{tpu_custom_call.1} parent=1 // pred_region
      %85 = dma.done [#allocation6], 256
    $region37: #{tpu_custom_call.1} parent=1 // pred_fallthru
      _
    // Predicated region
    $region38: #{tpu_custom_call.1} parent=1 // pred_check
      _
    $region39: #{tpu_custom_call.1} parent=1 // pred_check_branch
      %87 = sbr.rel (0) target = $region41
    $region40: #{tpu_custom_call.1} parent=1 // pred_region
      %89 = dma.done [#allocation9], 256
    $region41: #{tpu_custom_call.1} parent=1 // pred_fallthru
      _
    %v91 = vld [vmem:[#allocation2] sm:$0xf]
    %v92 = vld [vmem:[#allocation2 + $0x4] sm:$0xf]
    %v93 = vld [vmem:[#allocation7] sm:$0xf]
    %v94 = vld [vmem:[#allocation7 + $0x4] sm:$0xf]
    %v95 = vld [vmem:[#allocation7 + $0x8] sm:$0xf]
    %v96 = vld [vmem:[#allocation7 + $0xc] sm:$0xf]
    %v97 = vld [vmem:[%s3] sm:$0x1]
    %v99 = vperm.slane %v97, 0
    %v103 = vunpack.c.l.b16 %v91
    %v104 = vunpack.c.l.b16 %v92
    %v105 = vpack.c.b16 %v104, %v103
    %v110 = vunpack.c.l.b16 %v93
    %v111 = vunpack.c.l.b16 %v94
    %v112 = vunpack.c.l.b16 %v95
    %v113 = vunpack.c.l.b16 %v96
    %v114 = vpack.c.b16 %v111, %v110
    %v115 = vpack.c.b16 %v113, %v112
    %vm118 = vcmask 261120
    %v120 = vsel %vm118, %v105, 0
    %122 = vmatpush.bf16.msra.mxu0 0
    %123 = vmatpush.bf16.msra.mxu0 0
    %124 = vmatpush.bf16.msra.mxu0 0
    %125 = vmatpush.bf16.msra.mxu0 0
    %126 = vmatpush.bf16.msra.mxu0 0
    %127 = vmatpush.bf16.msra.mxu0 0
    %128 = vmatpush.bf16.msra.mxu0 %v115
    %129 = vmatpush.bf16.msra.mxu0 %v114
    %130 = vmatmul.bf16.gmra.mxu0 %v120
    %v131 = vpop.f32.mrf.mxu0
    %v132 = vadd.f32 %v99, %v131
    %v133 = vpop.f32.mrf.mxu0
    %v134 = vadd.f32 %v99, %v133
    %135 = vdwg.mxu0
    %v136 = vld [vmem:[#allocation5] sm:$0xf]
    %v137 = vld [vmem:[#allocation5 + $0x4] sm:$0xf]
    %v138 = vld [vmem:[#allocation8] sm:$0xf]
    %v139 = vld [vmem:[#allocation8 + $0x4] sm:$0xf]
    %v140 = vld [vmem:[#allocation8 + $0x8] sm:$0xf]
    %v141 = vld [vmem:[#allocation8 + $0xc] sm:$0xf]
    %v142 = vld [vmem:[%s5] sm:$0x1]
    %v144 = vperm.slane %v142, 0
    %v148 = vunpack.c.l.b16 %v136
    %v149 = vunpack.c.l.b16 %v137
    %v150 = vpack.c.b16 %v149, %v148
    %v155 = vunpack.c.l.b16 %v138
    %v156 = vunpack.c.l.b16 %v139
    %v157 = vunpack.c.l.b16 %v140
    %v158 = vunpack.c.l.b16 %v141
    %v159 = vpack.c.b16 %v156, %v155
    %v160 = vpack.c.b16 %v158, %v157
    %v164 = vsel %vm118, %v150, 0
    %166 = vmatpush.bf16.msra.mxu0 0
    %167 = vmatpush.bf16.msra.mxu0 0
    %168 = vmatpush.bf16.msra.mxu0 0
    %169 = vmatpush.bf16.msra.mxu0 0
    %170 = vmatpush.bf16.msra.mxu0 0
    %171 = vmatpush.bf16.msra.mxu0 0
    %172 = vmatpush.bf16.msra.mxu0 %v160
    %173 = vmatpush.bf16.msra.mxu0 %v159
    %174 = vmatmul.bf16.gmra.mxu0 %v164
    %v175 = vpop.f32.mrf.mxu0
    %v176 = vadd.f32 %v144, %v175
    %v177 = vpop.f32.mrf.mxu0
    %v178 = vadd.f32 %v144, %v177
    %179 = vdwg.mxu0
    %v180 = vpack.c.bf16 %v132, %v132
    %v181 = vpack.c.bf16 %v134, %v134
    %vm182 = vcmask 257024
    %183 = vst.msk [vmem:[#allocation10] sm:$0xf] %vm182, %v180
    %184 = vst.msk [vmem:[#allocation10 + $0x4] sm:$0xf] %vm182, %v181
    %v185 = vpack.c.bf16 %v176, %v176
    %v186 = vpack.c.bf16 %v178, %v178
    %187 = vst.msk [vmem:[#allocation11] sm:$0xf] %vm182, %v185
    %188 = vst.msk [vmem:[#allocation11 + $0x4] sm:$0xf] %vm182, %v186
    // Predicated region
    $region42: #{tpu_custom_call.1} parent=1 // pred_check
      _
    $region43: #{tpu_custom_call.1} parent=1 // pred_check_branch
      %190 = sbr.rel (0) target = $region45
    $region44: #{tpu_custom_call.1} parent=1 // pred_region
      %192 = vsyncadd [#allocation4], 0
      %s193 = sshll.u32 [#allocation10], 4
      %s194 = int_to_ptr.vmem [resolvable:$true] %s193
      %s195 = sshll.u32 %s6, 4
      %s196 = int_to_ptr.hbm [resolvable:$true] %s195
      %201 = dma.vmem_to_hbm [thread:$0]  %s194, 128, %s196, [#allocation4], 64, 64, 4
    $region45: #{tpu_custom_call.1} parent=1 // pred_fallthru
      _
    // Predicated region
    $region46: #{tpu_custom_call.1} parent=1 // pred_check
      _
    $region47: #{tpu_custom_call.1} parent=1 // pred_check_branch
      %203 = sbr.rel (0) target = $region49
    $region48: #{tpu_custom_call.1} parent=1 // pred_region
      %205 = vsyncadd [#allocation12], 0
      %s206 = sshll.u32 [#allocation11], 4
      %s207 = int_to_ptr.vmem [resolvable:$true] %s206
      %s208 = sshll.u32 %s7, 4
      %s209 = int_to_ptr.hbm [resolvable:$true] %s208
      %214 = dma.vmem_to_hbm [thread:$0]  %s207, 128, %s209, [#allocation12], 64, 64, 4
    $region49: #{tpu_custom_call.1} parent=1 // pred_fallthru
      _
    // Predicated region
    $region50: #{tpu_custom_call.1} parent=1 // pred_check
      _
    $region51: #{tpu_custom_call.1} parent=1 // pred_check_branch
      %216 = sbr.rel (0) target = $region53
    $region52: #{tpu_custom_call.1} parent=1 // pred_region
      %218 = dma.done [#allocation4], 128
    $region53: #{tpu_custom_call.1} parent=1 // pred_fallthru
      _
    // Predicated region
    $region54: #{tpu_custom_call.1} parent=1 // pred_check
      _
    $region55: #{tpu_custom_call.1} parent=1 // pred_check_branch
      %220 = sbr.rel (0) target = $region57
    $region56: #{tpu_custom_call.1} parent=1 // pred_region
      %222 = dma.done [#allocation12], 128
    $region57: #{tpu_custom_call.1} parent=1 // pred_fallthru
      _
    %223 = vsyncpa [#allocation3], 1
    %224 = vsyncpa [#allocation6], 1
    %225 = vsyncpa [#allocation9], 1
    %226 = vsyncpa [#allocation4], 1
    %227 = vsyncpa [#allocation12], 1

</llo_original>
